<compile_context>
chip_gen: v5e
topology: v5e:2x2
jax: 0.10.0
libtpu: 0.0.40
codegen_flags: <defaults>
</compile_context>

<pallas_src>
import jax
import jax.numpy as jnp
import numpy as np
from jax.experimental import pallas as pl
from jax.experimental.pallas import tpu as pltpu

_LANE = 128
_OUT_ROWS = 8  # rows 0-3 box, 4 conf, 5 keep mask, 6-7 zero pad (full-sublane store)


def _make_split_kernel(n_anchors, rows_in):
    """Kernel closure over static N (anchors) and number of input rows."""

    def kernel(thr_ref, x_ref, out_ref):
        # thr_ref: SMEM (1,) float32 threshold
        # x_ref:   (rows_in, tn) channels: 0-3 box, 4 conf, >=5 ignored (class scores)
        # out_ref: (8, tn)
        tn = out_ref.shape[1]
        thr = thr_ref[0]

        # Global anchor index -> mask the ragged tail in-kernel (no padded copy).
        base = pl.program_id(0) * tn
        lane = jax.lax.broadcasted_iota(jnp.int32, (1, tn), 1)
        in_range = (base + lane) < n_anchors                       # (1, tn)

        x = x_ref[...]                                             # (rows_in, tn)
        conf = x[4:5, :]                                           # (1, tn)
        keep = jnp.logical_and(conf.astype(jnp.float32) > thr, in_range)

        if rows_in == 8:
            # Sublane-iota select over the whole 8-row container: each output
            # vreg written exactly once, stays on the VPU, no sublane shuffles.
            sub = jax.lax.broadcasted_iota(jnp.int32, (_OUT_ROWS, tn), 0)
            zeros = jnp.zeros_like(x)
            vals = jnp.where(keep, x, zeros)                       # masked rows 0-7
            mask_row = jnp.broadcast_to(keep.astype(x.dtype), (_OUT_ROWS, tn))
            out = jnp.where(sub < 5, vals,                         # box + conf
                            jnp.where(sub == 5, mask_row, zeros))  # mask / zero pad
        else:
            # Fallback when C < 8 (input block cannot carry 8 rows).
            zero1 = jnp.zeros((1, tn), dtype=x.dtype)
            box = jnp.where(keep, x[0:4, :], jnp.zeros_like(x[0:4, :]))
            conf_m = jnp.where(keep, conf, zero1)
            mask_row = keep.astype(x.dtype)
            pad = jnp.zeros((_OUT_ROWS - 6, tn), dtype=x.dtype)
            out = jnp.concatenate([box, conf_m, mask_row, pad], axis=0)

        out_ref[...] = out

    return kernel


def _choose_tile(nb, per_lane_bytes, budget_bytes, min_grid):
    """Smallest split g (>= min_grid) whose lane tile fits the VMEM budget."""
    g = max(1, min_grid)
    while True:
        tn = _LANE * (-(-nb // g))          # 128 * cdiv(nb, g)
        if tn * per_lane_bytes <= budget_bytes or tn == _LANE:
            return tn
        g += 1


def out_splitter_forward(yolo_raw_output, score_threshold=0.5, max_detections=None):
    """yolo_raw_output: (B, C, N), channels = (cx, cy, w, h, conf, ...)."""
    B, C, N = yolo_raw_output.shape
    assert C >= 5, "need at least 5 channels (cx, cy, w, h, conf)"
    dtype = yolo_raw_output.dtype

    rows_in = 8 if C >= 8 else C            # 8-row block (divisible by 8) or full dim
    nb = -(-N // _LANE)                     # number of 128-lane blocks

    # VMEM budget for the per-step footprint (double-buffered in + out tiles).
    try:
        vmem_budget = pltpu.get_tpu_info().vmem_capacity_bytes // 8
    except Exception:
        vmem_budget = 16 * 1024 * 1024
    vmem_budget = min(int(vmem_budget), 16 * 1024 * 1024)

    bytes_per = jnp.dtype(dtype).itemsize
    per_lane_bytes = 2 * (rows_in + _OUT_ROWS) * bytes_per
    min_grid = 2 if nb >= 2 else 1          # keep both v7x TensorCores busy
    tn = _choose_tile(nb, per_lane_bytes, vmem_budget, min_grid)
    grid = -(-nb // (tn // _LANE))
    n_out = grid * tn                       # output padded to the grid (<128*grid extra)

    thr = jnp.asarray([score_threshold], dtype=jnp.float32)   # f32 SMEM scalar

    slab = pl.pallas_call(
        _make_split_kernel(N, rows_in),
        out_shape=jax.ShapeDtypeStruct((_OUT_ROWS, n_out), dtype),
        grid=(grid,),
        in_specs=[
            pl.BlockSpec(memory_space=pltpu.MemorySpace.SMEM),             # threshold
            pl.BlockSpec((None, rows_in, tn), lambda i: (0, 0, i)),        # batch-0 rows
        ],
        out_specs=pl.BlockSpec((_OUT_ROWS, tn), lambda i: (0, i)),
        compiler_params=pltpu.CompilerParams(dimension_semantics=("parallel",)),
    )(thr, yolo_raw_output)

    # Post-kernel compaction: padding lanes carry a zero mask, so they never count.
    keep_mask = slab[5] > 0                                    # (n_out,)
    num_valid = jnp.sum(keep_mask, dtype=jnp.int32)

    K = N if max_detections is None else int(min(max_detections, N))
    # TODO(synk): dynamic-shaped boolean row filtering has no static-shape
    # equivalent; valid rows are stably compacted to the front instead.
    idx = jnp.nonzero(keep_mask, size=K, fill_value=0)[0]      # stable, O(N)
    compact = slab[:, idx].T                                   # gather cols, then tiny (8,K)->(K,8)
    row_ok = (jnp.arange(K) < num_valid)[:, None]
    compact = jnp.where(row_ok, compact, jnp.zeros_like(compact))

    cxcywh_padded = compact[:, :4]                             # (K, 4)
    conf_padded = compact[:, 4]                                # (K,)
    return cxcywh_padded, conf_padded, jnp.minimum(num_valid, K)


def _numpy_reference(yolo_raw, thr):
    out_np = np.transpose(np.asarray(yolo_raw), (0, 2, 1))[0]
    keep_np = out_np[:, 4] > thr
    return out_np[keep_np][:, :4], out_np[keep_np][:, 4]


if __name__ == "__main__":
    # Main path: C >= 8 (box + conf + class scores), ragged N (not a multiple of 128).
    B, C, N = 1, 8, 300
    key = jax.random.PRNGKey(0)
    kbox, kconf, kcls = jax.random.split(key, 3)
    boxes = jax.random.normal(kbox, (B, 4, N), dtype=jnp.float32)
    confs = jax.random.uniform(kconf, (B, 1, N), dtype=jnp.float32)
    clss = jax.random.uniform(kcls, (B, C - 5, N), dtype=jnp.float32)
    yolo_raw = jnp.concatenate([boxes, confs, clss], axis=1)   # (B, C, N)

    cxcywh_pad, conf_pad, n_valid = out_splitter_forward(yolo_raw, 0.5)
    jax.block_until_ready((cxcywh_pad, conf_pad, n_valid))

    ref_box, ref_conf = _numpy_reference(yolo_raw, 0.5)
    k = int(n_valid)
    assert k == ref_box.shape[0]
    np.testing.assert_allclose(np.asarray(cxcywh_pad)[:k], ref_box, rtol=1e-6, atol=1e-6)
    np.testing.assert_allclose(np.asarray(conf_pad)[:k], ref_conf, rtol=1e-6, atol=1e-6)

    # Fallback path: C == 5 head (no class-score rows), N multiple of 128.
    y5 = yolo_raw[:, :5, :256]
    b5, c5, n5 = out_splitter_forward(y5, 0.5)
    jax.block_until_ready((b5, c5, n5))
    ref_box5, ref_conf5 = _numpy_reference(y5, 0.5)
    k5 = int(n5)
    assert k5 == ref_box5.shape[0]
    np.testing.assert_allclose(np.asarray(b5)[:k5], ref_box5, rtol=1e-6, atol=1e-6)
    np.testing.assert_allclose(np.asarray(c5)[:k5], ref_conf5, rtol=1e-6, atol=1e-6)

    print("KERNEL_OK")
</pallas_src>

<mosaic_0001>
module attributes {stable_mosaic.version = 11 : i64} {
  func.func @kernel(%arg0: i32, %arg1: memref<1xf32, #tpu.memory_space<smem>>, %arg2: memref<1x8x256xf32, #tpu.memory_space<vmem>>, %arg3: memref<8x256xf32, #tpu.memory_space<vmem>>) attributes {dimension_semantics = [#tpu.dimension_semantics<parallel>], iteration_bounds = array<i64: 2>, scalar_prefetch = 0 : i64, scratch_operands = 0 : i64, tpu.core_type = #tpu.core_type<tc>, window_params = [{transform_indices = @transform_0, window_bounds = array<i64: 1>}, {transform_indices = @transform_1, window_bounds = array<i64: 1, 8, 256>}, {transform_indices = @transform_2, window_bounds = array<i64: 8, 256>}]} {
    %c0 = arith.constant 0 : index
    %0 = memref.load %arg1[%c0] : memref<1xf32, #tpu.memory_space<smem>>
    %c256_i32 = arith.constant 256 : i32
    %1 = arith.muli %arg0, %c256_i32 : i32
    %2 = tpu.iota {dimensions = array<i32: 1>} : vector<1x256xi32>
    %3 = vector.broadcast %1 : i32 to vector<1x256xi32>
    %4 = arith.addi %3, %2 : vector<1x256xi32>
    %c300_i32 = arith.constant 300 : i32
    %5 = vector.broadcast %c300_i32 : i32 to vector<1x256xi32>
    %6 = arith.cmpi slt, %4, %5 : vector<1x256xi32>
    %c0_0 = arith.constant 0 : index
    %c0_1 = arith.constant 0 : index
    %c0_2 = arith.constant 0 : index
    %7 = vector.load %arg2[%c0_0, %c0_1, %c0_2] : memref<1x8x256xf32, #tpu.memory_space<vmem>>, vector<1x8x256xf32>
    %8 = vector.shape_cast %7 : vector<1x8x256xf32> to vector<8x256xf32>
    %9 = vector.extract_strided_slice %8 {offsets = [4, 0], sizes = [1, 256], strides = [1, 1]} : vector<8x256xf32> to vector<1x256xf32>
    %10 = vector.broadcast %0 : f32 to vector<1x256xf32>
    %11 = arith.cmpf ogt, %9, %10 : vector<1x256xf32>
    %12 = arith.andi %11, %6 : vector<1x256xi1>
    %13 = tpu.iota {dimensions = array<i32: 0>} : vector<8x256xi32>
    %cst = arith.constant 0.000000e+00 : f32
    %14 = vector.broadcast %cst : f32 to vector<8x256xf32>
    %15 = vector.shape_cast %12 : vector<1x256xi1> to vector<1x256xi1>
    %16 = vector.broadcast %15 : vector<1x256xi1> to vector<8x256xi1>
    %17 = arith.select %16, %8, %14 : vector<8x256xi1>, vector<8x256xf32>
    %18 = arith.extui %12 : vector<1x256xi1> to vector<1x256xi32>
    %19 = arith.sitofp %18 : vector<1x256xi32> to vector<1x256xf32>
    %20 = vector.shape_cast %19 : vector<1x256xf32> to vector<1x256xf32>
    %21 = vector.broadcast %20 : vector<1x256xf32> to vector<8x256xf32>
    %c5_i32 = arith.constant 5 : i32
    %22 = vector.broadcast %c5_i32 : i32 to vector<8x256xi32>
    %23 = arith.cmpi slt, %13, %22 : vector<8x256xi32>
    %c5_i32_3 = arith.constant 5 : i32
    %24 = vector.broadcast %c5_i32_3 : i32 to vector<8x256xi32>
    %25 = arith.cmpi eq, %13, %24 : vector<8x256xi32>
    %26 = arith.select %25, %21, %14 : vector<8x256xi1>, vector<8x256xf32>
    %27 = arith.select %23, %17, %26 : vector<8x256xi1>, vector<8x256xf32>
    %c0_4 = arith.constant 0 : index
    %c0_5 = arith.constant 0 : index
    %28 = vector.load %arg3[%c0_4, %c0_5] : memref<8x256xf32, #tpu.memory_space<vmem>>, vector<8x256xf32>
    tpu.vector_store %arg3[%c0_4, %c0_5], %27 {strides = array<i32>} : memref<8x256xf32, #tpu.memory_space<vmem>>, vector<8x256xf32>,
    return
  }
  func.func @transform_0(%arg0: i32) -> i32 {
    %c0_i32 = arith.constant 0 : i32
    %c0_i32_0 = arith.constant 0 : i32
    return %c0_i32 : i32
  }
  func.func @transform_1(%arg0: i32) -> (i32, i32, i32) {
    %c0_i32 = arith.constant 0 : i32
    %c0_i32_0 = arith.constant 0 : i32
    %c0_i32_1 = arith.constant 0 : i32
    return %c0_i32, %c0_i32_0, %arg0 : i32, i32, i32
  }
  func.func @transform_2(%arg0: i32) -> (i32, i32) {
    %c0_i32 = arith.constant 0 : i32
    %c0_i32_0 = arith.constant 0 : i32
    return %c0_i32, %arg0 : i32, i32
  }
}

</mosaic_0001>

<llo_original>
// kernel: tpu_custom_call.1
$region0: #{tpu_custom_call.1}
  #allocation0 [shape = 'u32[]', space=smem, size = 0x4, offset = 0x4, fixed_abs, tag = 'smem constant byte address 0x4 - core index']
  #allocation1 [shape = 'u32[72,128]{1,0:T(1,128)}', space=vmem, size = 0x9000, scoped, tag = 'internal scratch']
  #allocation2 [shape = 'f32[1]{0:T(128)S(6)}', space=smem, size = 0x200, scoped, tag = 'scoped memory for tpu_custom_call.1']
  %s0 = inlined_call_operand.<no memory space> [shape: f32[1], index: 0, kind: input, shape index: {}]
  %s1 = inlined_call_operand.hbm [shape: f32[1,8,300], index: 1, kind: input, shape index: {}]
  %s2 = inlined_call_operand.hbm [shape: f32[8,512], index: 2, kind: output, shape index: {}]
  %s3 = sld [smem:[#allocation0]]
  $region45: #{tpu_custom_call.1} parent=0
    _
  %s5 = ssub.s32 1, %s3
  %s6 = scalar_select 0, %s5, %s3
  %7 = sst [smem:[#allocation2]] %s0
  $region1: #{tpu_custom_call.1} parent=0
    #allocation3 [shape = 'u8[16384]{0}', space=vmem, size = 0x4000, scoped, tag = 'input window, operand 1']
    #allocation4 [shape = 's32[2]{0}', space=sflag, size = 0x8, scoped, tag = 'scoped memory for tpu_custom_call.1']
    #allocation5 [shape = 's32[2]{0}', space=sflag, size = 0x8, scoped, tag = 'scoped memory for tpu_custom_call.1']
    #allocation6 [shape = 'u8[16384]{0}', space=vmem, size = 0x4000, scoped, tag = 'output window, operand 0']
    %8 = vsyncpa [#allocation4], 0
    %s9 = scalar_lea.sflag [#allocation4], 1
    %10 = vsyncpa %s9, 0
    %11 = vsyncpa [#allocation5], 0
    %s12 = scalar_lea.sflag [#allocation5], 1
    %13 = vsyncpa %s12, 0
    loop: start=0, step=1, limit=4
    $region2: #{tpu_custom_call.1} parent=1 // loop_pre_header
      _
    $region3: #{tpu_custom_call.1} parent=1 // loop_header
      %s15 = sphi 0, %s19
      %p16 = scmp.ge.s32.totalorder %s15, 4
      %s23 = sphi 0, %s23
      %s25 = sphi 0, %s23
      %s26 = sphi 0, %s25
      %s40 = sphi 0, %s26
      %s46 = sphi 0, %s48
      %s49 = sphi 0, %s46
      %s50 = sphi 0, %s49
      %s66 = sphi 0, %s50
      %s72 = sphi 0, %s74
      %s75 = sphi 0, %s72
      %s76 = sphi 0, %s75
      %s92 = sphi 0, %s76
    $region4: #{tpu_custom_call.1} parent=1 // loop_header_branch
      %18 = sbr.rel (%p16) target = $region8
    $region5: #{tpu_custom_call.1} parent=1 // loop_body
      %s20 = ssub.s32 %s15, 1
      %s21 = ssub.s32 %s15, 2
      %s22 = sadd.s32 %s15, 1
      %s24 = sadd.s32 %s23, 1
      %p27 = scmp.eq.s32.totalorder %s15, 1
      %p28 = scmp.ne.s32.totalorder %s23, %s25
      %p29 = scmp.eq.s32.totalorder %s15, 0
      %p30 = por %p28, %p29
      %p31 = scmp.ne.s32.totalorder %s23, %s25
      %p32 = scmp.eq.s32.totalorder %s20, 1
      %p33 = por %p31, %p32
      %p34 = scmp.ne.s32.totalorder %s25, %s26
      %p35 = scmp.eq.s32.totalorder %s20, 0
      %p36 = por %p34, %p35
      %p37 = scmp.ne.s32.totalorder %s25, %s26
      %p38 = scmp.eq.s32.totalorder %s21, 1
      %p39 = por %p37, %p38
      %p41 = scmp.ne.s32.totalorder %s26, %s40
      %p42 = scmp.eq.s32.totalorder %s21, 0
      %p43 = por %p41, %p42
      %s44 = ssub.s32 %s15, %s22
      %p45 = scmp.eq.s32.totalorder %s44, 0
      %s47 = sadd.s32 %s46, 1
      %s48 = scalar_select %p45, %s46, %s47
      %p51 = pneg %p45
      %p52 = scmp.eq.s32.totalorder %s15, 1
      %p53 = por %p51, %p52
      %p54 = scmp.ne.s32.totalorder %s46, %s49
      %p55 = scmp.eq.s32.totalorder %s15, 0
      %p56 = por %p54, %p55
      %p57 = scmp.ne.s32.totalorder %s46, %s49
      %p58 = scmp.eq.s32.totalorder %s20, 1
      %p59 = por %p57, %p58
      %p60 = scmp.ne.s32.totalorder %s49, %s50
      %p61 = scmp.eq.s32.totalorder %s20, 0
      %p62 = por %p60, %p61
      %p63 = scmp.ne.s32.totalorder %s49, %s50
      %p64 = scmp.eq.s32.totalorder %s21, 1
      %p65 = por %p63, %p64
      %p67 = scmp.ne.s32.totalorder %s50, %s66
      %p68 = scmp.eq.s32.totalorder %s21, 0
      %p69 = por %p67, %p68
      %s70 = ssub.s32 %s15, %s22
      %p71 = scmp.eq.s32.totalorder %s70, 0
      %s73 = sadd.s32 %s72, 1
      %s74 = scalar_select %p71, %s72, %s73
      %p77 = pneg %p71
      %p78 = scmp.eq.s32.totalorder %s15, 1
      %p79 = por %p77, %p78
      %p80 = scmp.ne.s32.totalorder %s72, %s75
      %p81 = scmp.eq.s32.totalorder %s15, 0
      %p82 = por %p80, %p81
      %p83 = scmp.ne.s32.totalorder %s72, %s75
      %p84 = scmp.eq.s32.totalorder %s20, 1
      %p85 = por %p83, %p84
      %p86 = scmp.ne.s32.totalorder %s75, %s76
      %p87 = scmp.eq.s32.totalorder %s20, 0
      %p88 = por %p86, %p87
      %p89 = scmp.ne.s32.totalorder %s75, %s76
      %p90 = scmp.eq.s32.totalorder %s21, 1
      %p91 = por %p89, %p90
      %p93 = scmp.ne.s32.totalorder %s76, %s92
      %p94 = scmp.eq.s32.totalorder %s21, 0
      %p95 = por %p93, %p94
      %p96 = scmp.le.s32.totalorder 1, %s15
      %p97 = scmp.lt.s32.totalorder %s15, 3
      %p98 = pnand %p96, %p97
      %p99 = pneg %p98
      // Predicated region
      $region9: #{tpu_custom_call.1} parent=5 // pred_check
        _
      $region10: #{tpu_custom_call.1} parent=5 // pred_check_branch
        %101 = sbr.rel (%p98) target = $region12
      $region11: #{tpu_custom_call.1} parent=5 // pred_region
        %s102 = ssub.s32 %s15, 1
        // Predicated region
        $region13: #{tpu_custom_call.1} parent=11 // pred_check
          %p103 = pneg %p36
        $region14: #{tpu_custom_call.1} parent=11 // pred_check_branch
          %105 = sbr.rel (%p103) target = $region16
        $region15: #{tpu_custom_call.1} parent=11 // pred_region
          _
        $region16: #{tpu_custom_call.1} parent=11 // pred_fallthru
          _
      $region12: #{tpu_custom_call.1} parent=5 // pred_fallthru
        _
      %p106 = scmp.lt.s32.totalorder %s15, 2
      // Predicated region
      $region17: #{tpu_custom_call.1} parent=5 // pred_check
        %p107 = pneg %p106
      $region18: #{tpu_custom_call.1} parent=5 // pred_check_branch
        %109 = sbr.rel (%p107) target = $region20
      $region19: #{tpu_custom_call.1} parent=5 // pred_region
        // Predicated region
        $region21: #{tpu_custom_call.1} parent=19 // pred_check
          %p110 = pneg %p56
        $region22: #{tpu_custom_call.1} parent=19 // pred_check_branch
          %112 = sbr.rel (%p110) target = $region24
        $region23: #{tpu_custom_call.1} parent=19 // pred_region
          %s113 = sand.u32 %s46, 1
          %s114 = scalar_lea.sflag [#allocation4], %s113
          %s115 = sand.u32 %s46, 1
          %s116 = smul.addr %s115, 16
          %s117 = scalar_lea.vmem [#allocation3], %s116
          %s118 = smul.u32 2, %s15
          %s119 = ssub.s32 3, %s118
          %p120 = scmp.lt.s32.totalorder %s119, 2
          %s121 = scalar_select %p120, %s119, 2
          %s122 = smul.u32 8, %s121
          %s123 = ssub.s32 16, %s122
          %s124 = sshll.u32 %s123, 4
          %125 = vsyncadd %s114, %s124
          %p126 = scmp.ne.s32.totalorder 0, %s122
          %s127 = smul.addr %s118, 8
          %s128 = scalar_lea.hbm %s1, %s127
          %s129 = smul.u32 %s121, 8
          %s130 = sshll.u32 %s129, 4
          %s131 = sshll.u32 %s128, 4
          %s132 = int_to_ptr.hbm [resolvable:$true] %s131
          %s133 = sshll.u32 %s117, 4
          %s134 = int_to_ptr.vmem [resolvable:$true] %s133
          %136 = dma.hbm_to_vmem [thread:$0]  (%p126), %s132, %s130, %s134, %s114
        $region24: #{tpu_custom_call.1} parent=19 // pred_fallthru
          _
      $region20: #{tpu_custom_call.1} parent=5 // pred_fallthru
        _
      %p137 = scmp.le.s32.totalorder 1, %s15
      %p138 = scmp.lt.s32.totalorder %s15, 3
      %p139 = pnand %p137, %p138
      %p140 = pneg %p139
      // Predicated region
      $region25: #{tpu_custom_call.1} parent=5 // pred_check
        _
      $region26: #{tpu_custom_call.1} parent=5 // pred_check_branch
        %142 = sbr.rel (%p139) target = $region28
      $region27: #{tpu_custom_call.1} parent=5 // pred_region
        %s143 = ssub.s32 %s15, 1
        %s144 = sand.u32 %s49, 1
        %s145 = scalar_lea.sflag [#allocation4], %s144
        %s146 = sand.u32 %s49, 1
        %s147 = smul.addr %s146, 16
        %s148 = scalar_lea.vmem [#allocation3], %s147
        // Predicated region
        $region29: #{tpu_custom_call.1} parent=27 // pred_check
          %p149 = pneg %p62
        $region30: #{tpu_custom_call.1} parent=27 // pred_check_branch
          %151 = sbr.rel (%p149) target = $region32
        $region31: #{tpu_custom_call.1} parent=27 // pred_region
          %153 = dma.done %s145, 256
        $region32: #{tpu_custom_call.1} parent=27 // pred_fallthru
          _
        %p154 = pneg %p36
        %p155 = pneg %p33
        %s156 = sand.u32 %s49, 1
        %s157 = scalar_lea.sflag [#allocation4], %s156
        %s158 = sand.u32 %s49, 1
        %s159 = smul.addr %s158, 16
        %s160 = scalar_lea.vmem [#allocation3], %s159
        %p161 = pneg %p62
        %p162 = pneg %p59
        %p163 = pneg %p88
        %p164 = pneg %p85
        %s165 = sand.u32 %s75, 1
        %s166 = scalar_lea.sflag [#allocation5], %s165
        %s167 = sand.u32 %s75, 1
        %s168 = smul.addr %s167, 16
        %s169 = scalar_lea.vmem [#allocation6], %s168
        %s170 = smul.u32 2, %s20
        %s171 = ssub.s32 3, %s170
        %p172 = scmp.lt.s32.totalorder %s171, 2
        %s173 = scalar_select %p172, %s171, 2
        %s174 = smul.u32 8, %s173
        %s175 = smul.u32 2, %s20
        %s176 = sld [smem:[#allocation2]]
        %s177 = smul.u32 %s20, 256
        %v178 = vlaneseq
        %v179 = vand.u32 %v178, 127
        %v180 = vadd.s32 %v179, 128
        %v181 = vstv %s177
        %v182 = vadd.s32 %v181, %v179
        %v183 = vadd.s32 %v181, %v180
        %vm184 = vcmp.lt.s32.totalorder %v182, 300
        %vm185 = vcmp.lt.s32.totalorder %v183, 300
        %v186 = vld [vmem:[%s148] sm:$0xff]
        %v187 = vld [vmem:[%s148 + $0x8] sm:$0xff]
        %v188 = vstv %s176
        %vm189 = vcmp.gt.f32.partialorder %v186, %v188
        %vm190 = vcmp.gt.f32.partialorder %v187, %v188
        %vm191 = vmand %vm189, %vm184
        %vm192 = vmand %vm190, %vm185
        %v193 = vlaneseq
        %v194 = vshrl.u32 %v193, 7
        %v195 = vsel %vm191, 1, 0
        %v196 = vsel %vm192, 1, 0
        %v197 = vperm.slane %v195, 4
        %v198 = vperm.slane %v196, 4
        %vm199 = vcmp.eq.s32.totalorder %v197, 1
        %vm200 = vcmp.eq.s32.totalorder %v198, 1
        %v201 = vsel %vm199, %v186, 0.0
        %v202 = vsel %vm200, %v187, 0.0
        %v203 = vcvt.s32.f32 %v195
        %v204 = vcvt.s32.f32 %v196
        %v205 = vperm.slane %v203, 4
        %v206 = vperm.slane %v204, 4
        %vm207 = vcmp.lt.s32.totalorder %v194, 5
        %vm208 = vcmp.eq.s32.totalorder %v194, 5
        %v209 = vsel %vm208, %v205, 0.0
        %v210 = vsel %vm208, %v206, 0.0
        %v211 = vsel %vm207, %v201, %v209
        %v212 = vsel %vm207, %v202, %v210
        %213 = vst [vmem:[%s169] sm:$0xff] %v211
        %214 = vst [vmem:[%s169 + $0x8] sm:$0xff] %v212
        %s215 = sand.u32 %s75, 1
        %s216 = scalar_lea.sflag [#allocation5], %s215
        %s217 = sand.u32 %s75, 1
        %s218 = smul.addr %s217, 16
        %s219 = scalar_lea.vmem [#allocation6], %s218
        // Predicated region
        $region33: #{tpu_custom_call.1} parent=27 // pred_check
          %p220 = pneg %p85
        $region34: #{tpu_custom_call.1} parent=27 // pred_check_branch
          %222 = sbr.rel (%p220) target = $region36
        $region35: #{tpu_custom_call.1} parent=27 // pred_region
          %s223 = smul.u32 2, %s20
          %225 = vsyncadd %s216, 0
          %s226 = smul.addr %s223, 8
          %s227 = scalar_lea.hbm %s2, %s226
          %s229 = sshll.u32 %s219, 4
          %s230 = int_to_ptr.vmem [resolvable:$true] %s229
          %s231 = sshll.u32 %s227, 4
          %s232 = int_to_ptr.hbm [resolvable:$true] %s231
          %234 = dma.vmem_to_hbm [thread:$0]  %s230, 256, %s232, %s216
        $region36: #{tpu_custom_call.1} parent=27 // pred_fallthru
          _
      $region28: #{tpu_custom_call.1} parent=5 // pred_fallthru
        _
      %p235 = scmp.le.s32.totalorder 2, %s15
      // Predicated region
      $region37: #{tpu_custom_call.1} parent=5 // pred_check
        %p236 = pneg %p235
      $region38: #{tpu_custom_call.1} parent=5 // pred_check_branch
        %238 = sbr.rel (%p236) target = $region40
      $region39: #{tpu_custom_call.1} parent=5 // pred_region
        %s239 = ssub.s32 %s15, 2
        // Predicated region
        $region41: #{tpu_custom_call.1} parent=39 // pred_check
          %p240 = pneg %p91
        $region42: #{tpu_custom_call.1} parent=39 // pred_check_branch
          %242 = sbr.rel (%p240) target = $region44
        $region43: #{tpu_custom_call.1} parent=39 // pred_region
          %s243 = sand.u32 %s76, 1
          %s244 = scalar_lea.sflag [#allocation5], %s243
          %s245 = sand.u32 %s76, 1
          %s246 = smul.addr %s245, 16
          %s247 = scalar_lea.vmem [#allocation6], %s246
          %249 = dma.done %s244, 256
        $region44: #{tpu_custom_call.1} parent=39 // pred_fallthru
          _
      $region40: #{tpu_custom_call.1} parent=5 // pred_fallthru
        _
    $region6: #{tpu_custom_call.1} parent=1 // loop_footer
      %s19 = sadd.s32 1, %s15
    $region7: #{tpu_custom_call.1} parent=1 // loop_footer_branch
      %14 = sbr.rel target = $region3
    $region8: #{tpu_custom_call.1} parent=1 // loop_exit
      _
    %250 = vsyncpa [#allocation4], 1
    %s251 = scalar_lea.sflag [#allocation4], 1
    %252 = vsyncpa %s251, 1
    %253 = vsyncpa [#allocation5], 1
    %s254 = scalar_lea.sflag [#allocation5], 1
    %255 = vsyncpa %s254, 1

</llo_original>
